<compile_context>
chip_gen: v7x
topology: tpu7x:2x2x1
jax: 0.10.0
libtpu: 0.0.40
codegen_flags: <defaults>
</compile_context>

<pallas_src>
import jax
import jax.numpy as jnp
from jax.experimental import pallas as pl
from jax.experimental.pallas import tpu as pltpu

MEMORY_SIZE = 1
IN_DIM = 8 * MEMORY_SIZE          # 8
H1, H2, H3, OUT = 16, 32, 8, 1

# Packed-parameter slab layout (sublane-row ranges of a (128, 128) f32 slab).
# Every static slice starts at a sublane offset that is a multiple of 8 and
# lane offset 0, so in-kernel slicing lowers cleanly and stays cheap.
PARAM_ROWS, PARAM_COLS = 128, 128
_W1_R, _W2_R, _W3_R, _W4T_R = (0, 16), (16, 48), (48, 56), (56, 64)
_B1_R, _B2_R, _B3_R, _B4_R = (64, 80), (80, 112), (112, 120), (120, 121)


def _round_up(x, m):
    return (x + m - 1) // m * m


def _critic_kernel(x_ref, p_ref, o_ref):
    """Fused 4-layer MLP in (features, batch) layout; batch on the lane axis."""
    x = x_ref[...]                                              # (8, TB) f32

    w1 = p_ref[_W1_R[0]:_W1_R[1], 0:IN_DIM]                     # (16, 8)
    w2 = p_ref[_W2_R[0]:_W2_R[1], 0:H1]                         # (32, 16)
    w3 = p_ref[_W3_R[0]:_W3_R[1], 0:H2]                         # (8, 32)
    w4t = p_ref[_W4T_R[0]:_W4T_R[1], 0:1]                       # (8, 1)  layer4 W^T
    b1 = p_ref[_B1_R[0]:_B1_R[1], 0:1]                          # (16, 1)
    b2 = p_ref[_B2_R[0]:_B2_R[1], 0:1]                          # (32, 1)
    b3 = p_ref[_B3_R[0]:_B3_R[1], 0:1]                          # (8, 1)
    b4 = p_ref[_B4_R[0]:_B4_R[1], 0:1]                          # (1, 1)

    h = jnp.tanh(jnp.dot(w1, x, preferred_element_type=jnp.float32) + b1)   # (16, TB)
    h = jnp.tanh(jnp.dot(w2, h, preferred_element_type=jnp.float32) + b2)   # (32, TB)
    h = jnp.tanh(jnp.dot(w3, h, preferred_element_type=jnp.float32) + b3)   # (8, TB)
    # Final Linear(8 -> 1): VPU multiply + sublane reduce (no N=1 MXU pass).
    v = jnp.tanh(jnp.sum(h * w4t, axis=0, keepdims=True) + b4)              # (1, TB)
    o_ref[...] = v.astype(o_ref.dtype)


def critic_net_forward(state, param_slab, *, batch_tile=512):
    """state: (B, 8*memory_size) float -> value: (B, 1) float32."""
    B, D = state.shape
    assert D == IN_DIM
    # Lane-multiple batch tile; a single grid step for small rollout batches.
    tb = _round_up(min(batch_tile, B), 128)
    bp = _round_up(B, tb)

    x_t = jnp.transpose(state.astype(jnp.float32))              # (8, B)
    if bp != B:
        x_t = jnp.pad(x_t, ((0, 0), (0, bp - B)))               # zero-pad batch

    out = pl.pallas_call(
        _critic_kernel,
        out_shape=jax.ShapeDtypeStruct((1, bp), jnp.float32),
        grid_spec=pltpu.PrefetchScalarGridSpec(
            num_scalar_prefetch=0,
            grid=(bp // tb,),
            in_specs=[
                pl.BlockSpec((IN_DIM, tb), lambda i: (0, i)),              # x tile
                pl.BlockSpec((PARAM_ROWS, PARAM_COLS), lambda i: (0, 0)),  # params (resident)
            ],
            out_specs=pl.BlockSpec((1, tb), lambda i: (0, i)),             # lane-dense store
        ),
        compiler_params=pltpu.CompilerParams(
            dimension_semantics=("parallel",)),
    )(x_t, param_slab)

    return jnp.transpose(out[:, :B])                            # (B, 1)


def init_params(key):
    """Synthetic parameters with the exact torch.nn.Linear shapes:
    weights (out, in), biases (out,), fan-in uniform init."""
    dims = [(IN_DIM, H1), (H1, H2), (H2, H3), (H3, OUT)]
    params = []
    for d_in, d_out in dims:
        key, kw, kb = jax.random.split(key, 3)
        bound = 1.0 / (d_in ** 0.5)
        w = jax.random.uniform(kw, (d_out, d_in), jnp.float32, -bound, bound)
        b = jax.random.uniform(kb, (d_out,), jnp.float32, -bound, bound)
        params.append((w, b))
    return params


def pack_params(params):
    """Pack the 4 (W, b) pairs into a single (128, 128) f32 VMEM slab."""
    (w1, b1), (w2, b2), (w3, b3), (w4, b4) = params
    slab = jnp.zeros((PARAM_ROWS, PARAM_COLS), jnp.float32)
    slab = slab.at[_W1_R[0]:_W1_R[1], 0:IN_DIM].set(w1)
    slab = slab.at[_W2_R[0]:_W2_R[1], 0:H1].set(w2)
    slab = slab.at[_W3_R[0]:_W3_R[1], 0:H2].set(w3)
    slab = slab.at[_W4T_R[0]:_W4T_R[1], 0].set(w4[0, :])   # store layer4 W as a column
    slab = slab.at[_B1_R[0]:_B1_R[1], 0].set(b1)
    slab = slab.at[_B2_R[0]:_B2_R[1], 0].set(b2)
    slab = slab.at[_B3_R[0]:_B3_R[1], 0].set(b3)
    slab = slab.at[_B4_R[0]:_B4_R[1], 0].set(b4)
    return slab


def critic_ref(state, params):
    """Pure-JAX reference matching the PyTorch forward()."""
    h = state
    for w, b in params:
        h = jnp.tanh(h @ w.T + b)
    return h


if __name__ == "__main__":
    key = jax.random.PRNGKey(0)
    k_params, k_s1, k_s2 = jax.random.split(key, 3)

    params = init_params(k_params)
    slab = pack_params(params)

    # Small rollout-style batch: single grid step, padded to one 128-lane tile.
    s1 = jax.random.normal(k_s1, (8, IN_DIM), dtype=jnp.float32)
    o1 = jax.block_until_ready(critic_net_forward(s1, slab))
    r1 = critic_ref(s1, params)
    assert o1.shape == (8, OUT)
    assert jnp.allclose(o1, r1, atol=1e-5, rtol=1e-5), "small-batch mismatch"

    # Training-style batch: multiple grid steps + tail padding (1000 -> 1024).
    s2 = jax.random.normal(k_s2, (1000, IN_DIM), dtype=jnp.float32)
    o2 = jax.block_until_ready(critic_net_forward(s2, slab, batch_tile=512))
    r2 = critic_ref(s2, params)
    assert o2.shape == (1000, OUT)
    assert jnp.allclose(o2, r2, atol=1e-5, rtol=1e-5), "large-batch mismatch"

    print("KERNEL_OK")
</pallas_src>

<mosaic_0001>
module attributes {stable_mosaic.version = 11 : i64} {
  func.func @_critic_kernel(%arg0: i32, %arg1: memref<8x128xf32, #tpu.memory_space<vmem>>, %arg2: memref<128x128xf32, #tpu.memory_space<vmem>>, %arg3: memref<1x128xf32, #tpu.memory_space<vmem>>) attributes {dimension_semantics = [#tpu.dimension_semantics<parallel>], iteration_bounds = array<i64: 1>, scalar_prefetch = 0 : i64, scratch_operands = 0 : i64, tpu.core_type = #tpu.core_type<tc>, window_params = [{transform_indices = @transform_0, window_bounds = array<i64: 8, 128>}, {pipeline_mode = #tpu.pipeline_mode<synchronous>, transform_indices = @transform_1, window_bounds = array<i64: 128, 128>}, {transform_indices = @transform_2, window_bounds = array<i64: 1, 128>}]} {
    %c0 = arith.constant 0 : index
    %c0_0 = arith.constant 0 : index
    %0 = vector.load %arg1[%c0, %c0_0] : memref<8x128xf32, #tpu.memory_space<vmem>>, vector<8x128xf32>
    %c0_1 = arith.constant 0 : index
    %c0_2 = arith.constant 0 : index
    %1 = vector.load %arg2[%c0_1, %c0_2] : memref<128x128xf32, #tpu.memory_space<vmem>>, vector<16x8xf32>
    %c16 = arith.constant 16 : index
    %c0_3 = arith.constant 0 : index
    %2 = vector.load %arg2[%c16, %c0_3] : memref<128x128xf32, #tpu.memory_space<vmem>>, vector<32x16xf32>
    %c48 = arith.constant 48 : index
    %c0_4 = arith.constant 0 : index
    %3 = vector.load %arg2[%c48, %c0_4] : memref<128x128xf32, #tpu.memory_space<vmem>>, vector<8x32xf32>
    %c56 = arith.constant 56 : index
    %c0_5 = arith.constant 0 : index
    %4 = vector.load %arg2[%c56, %c0_5] : memref<128x128xf32, #tpu.memory_space<vmem>>, vector<8x1xf32>
    %c64 = arith.constant 64 : index
    %c0_6 = arith.constant 0 : index
    %5 = vector.load %arg2[%c64, %c0_6] : memref<128x128xf32, #tpu.memory_space<vmem>>, vector<16x1xf32>
    %c80 = arith.constant 80 : index
    %c0_7 = arith.constant 0 : index
    %6 = vector.load %arg2[%c80, %c0_7] : memref<128x128xf32, #tpu.memory_space<vmem>>, vector<32x1xf32>
    %c112 = arith.constant 112 : index
    %c0_8 = arith.constant 0 : index
    %7 = vector.load %arg2[%c112, %c0_8] : memref<128x128xf32, #tpu.memory_space<vmem>>, vector<8x1xf32>
    %c120 = arith.constant 120 : index
    %c0_9 = arith.constant 0 : index
    %8 = vector.load %arg2[%c120, %c0_9] : memref<128x128xf32, #tpu.memory_space<vmem>>, vector<1x1xf32>
    %cst = arith.constant dense<0.000000e+00> : vector<16x128xf32>
    %9 = tpu.matmul %1, %0, %cst {dimension_numbers = #tpu.dot_dimension_numbers<[1], [0], [0], [1], [0, 0, 1, 1], [], []>} : vector<16x8xf32>, vector<8x128xf32>, vector<16x128xf32> -> vector<16x128xf32>
    %10 = vector.broadcast %5 : vector<16x1xf32> to vector<16x128xf32>
    %11 = arith.addf %9, %10 : vector<16x128xf32>
    %12 = math.tanh %11 : vector<16x128xf32>
    %cst_10 = arith.constant dense<0.000000e+00> : vector<32x128xf32>
    %13 = tpu.matmul %2, %12, %cst_10 {dimension_numbers = #tpu.dot_dimension_numbers<[1], [0], [0], [1], [0, 0, 1, 1], [], []>} : vector<32x16xf32>, vector<16x128xf32>, vector<32x128xf32> -> vector<32x128xf32>
    %14 = vector.broadcast %6 : vector<32x1xf32> to vector<32x128xf32>
    %15 = arith.addf %13, %14 : vector<32x128xf32>
    %16 = math.tanh %15 : vector<32x128xf32>
    %cst_11 = arith.constant dense<0.000000e+00> : vector<8x128xf32>
    %17 = tpu.matmul %3, %16, %cst_11 {dimension_numbers = #tpu.dot_dimension_numbers<[1], [0], [0], [1], [0, 0, 1, 1], [], []>} : vector<8x32xf32>, vector<32x128xf32>, vector<8x128xf32> -> vector<8x128xf32>
    %18 = vector.broadcast %7 : vector<8x1xf32> to vector<8x128xf32>
    %19 = arith.addf %17, %18 : vector<8x128xf32>
    %20 = math.tanh %19 : vector<8x128xf32>
    %21 = vector.broadcast %4 : vector<8x1xf32> to vector<8x128xf32>
    %22 = arith.mulf %20, %21 : vector<8x128xf32>
    %cst_12 = arith.constant dense<0.000000e+00> : vector<128xf32>
    %23 = vector.multi_reduction <add>, %22, %cst_12 [0] : vector<8x128xf32> to vector<128xf32>
    %24 = vector.shape_cast %23 : vector<128xf32> to vector<1x128xf32>
    %25 = vector.broadcast %8 : vector<1x1xf32> to vector<1x128xf32>
    %26 = arith.addf %24, %25 : vector<1x128xf32>
    %27 = math.tanh %26 : vector<1x128xf32>
    %c0_13 = arith.constant 0 : index
    %c0_14 = arith.constant 0 : index
    %28 = vector.load %arg3[%c0_13, %c0_14] : memref<1x128xf32, #tpu.memory_space<vmem>>, vector<1x128xf32>
    tpu.vector_store %arg3[%c0_13, %c0_14], %27 {strides = array<i32>} : memref<1x128xf32, #tpu.memory_space<vmem>>, vector<1x128xf32>,
    return
  }
  func.func @transform_0(%arg0: i32) -> (i32, i32) {
    %c0_i32 = arith.constant 0 : i32
    %c0_i32_0 = arith.constant 0 : i32
    return %c0_i32, %arg0 : i32, i32
  }
  func.func @transform_1(%arg0: i32) -> (i32, i32) {
    %c0_i32 = arith.constant 0 : i32
    %c0_i32_0 = arith.constant 0 : i32
    %c0_i32_1 = arith.constant 0 : i32
    return %c0_i32, %c0_i32_0 : i32, i32
  }
  func.func @transform_2(%arg0: i32) -> (i32, i32) {
    %c0_i32 = arith.constant 0 : i32
    %c0_i32_0 = arith.constant 0 : i32
    return %c0_i32, %arg0 : i32, i32
  }
}

</mosaic_0001>

<llo_original>
// kernel: tpu_custom_call.1
$region0: #{tpu_custom_call.1}
  #allocation0 [shape = 'u32[]', space=smem, size = 0x4, offset = 0x4, fixed_abs, tag = 'smem constant byte address 0x4 - core index']
  #allocation1 [shape = 'u32[144,128]{1,0:T(1,128)}', space=vmem, size = 0x12000, scoped, tag = 'internal scratch']
  %s0 = inlined_call_operand.hbm [shape: f32[8,128], index: 0, kind: input, shape index: {}]
  %s1 = inlined_call_operand.hbm [shape: f32[128,128], index: 1, kind: input, shape index: {}]
  %s2 = inlined_call_operand.hbm [shape: f32[1,128], index: 2, kind: output, shape index: {}]
  %s3 = sld [smem:[#allocation0]]
  $region26: #{tpu_custom_call.1} parent=0
    _
  %s5 = ssub.s32 1, %s3
  %s6 = scalar_select 0, %s5, %s3
  $region1: #{tpu_custom_call.1} parent=0
    #allocation2 [shape = 'u8[4096]{0}', space=vmem, size = 0x1000, scoped, tag = 'input window, operand 0, single buffered']
    #allocation3 [shape = 's32[1]{0}', space=sflag, size = 0x4, scoped, tag = 'scoped memory for tpu_custom_call.1']
    #allocation4 [shape = 's32[1]{0}', space=sflag, size = 0x4, scoped, tag = 'scoped memory for tpu_custom_call.1']
    #allocation5 [shape = 'u8[65536]{0}', space=vmem, size = 0x10000, scoped, tag = 'input window, operand 1, single buffered']
    #allocation6 [shape = 's32[1]{0}', space=sflag, size = 0x4, scoped, tag = 'scoped memory for tpu_custom_call.1']
    #allocation7 [shape = 'u8[512]{0}', space=vmem, size = 0x400, scoped, tag = 'output window, operand 0, single buffered']
    %7 = vsyncpa [#allocation3], 0
    %8 = vsyncpa [#allocation6], 0
    %9 = vsyncpa [#allocation4], 0
    // Predicated region
    $region2: #{tpu_custom_call.1} parent=1 // pred_check
      _
    $region3: #{tpu_custom_call.1} parent=1 // pred_check_branch
      %11 = sbr.rel (0) target = $region5
    $region4: #{tpu_custom_call.1} parent=1 // pred_region
      %s13 = ssub.s32 128, 128
      %14 = vsyncadd [#allocation3], %s13
      %s16 = sshll.u32 [#allocation2], 4
      %s17 = int_to_ptr.vmem [resolvable:$true] %s16
      %19 = dma.hbm_to_vmem [thread:$0]  %s0, 128, %s17, [#allocation3]
    $region5: #{tpu_custom_call.1} parent=1 // pred_fallthru
      _
    // Predicated region
    $region6: #{tpu_custom_call.1} parent=1 // pred_check
      _
    $region7: #{tpu_custom_call.1} parent=1 // pred_check_branch
      %21 = sbr.rel (0) target = $region9
    $region8: #{tpu_custom_call.1} parent=1 // pred_region
      %s23 = ssub.s32 2048, 2048
      %24 = vsyncadd [#allocation6], %s23
      %s25 = sshll.u32 [#allocation5], 4
      %s26 = int_to_ptr.vmem [resolvable:$true] %s25
      %31 = dma.hbm_to_vmem [thread:$0]  %s1, 2048, %s26, [#allocation6], 128, 128, 8
    $region9: #{tpu_custom_call.1} parent=1 // pred_fallthru
      _
    // Predicated region
    $region10: #{tpu_custom_call.1} parent=1 // pred_check
      _
    $region11: #{tpu_custom_call.1} parent=1 // pred_check_branch
      %33 = sbr.rel (0) target = $region13
    $region12: #{tpu_custom_call.1} parent=1 // pred_region
      %34 = dma.done [#allocation3], 128
    $region13: #{tpu_custom_call.1} parent=1 // pred_fallthru
      _
    // Predicated region
    $region14: #{tpu_custom_call.1} parent=1 // pred_check
      _
    $region15: #{tpu_custom_call.1} parent=1 // pred_check_branch
      %36 = sbr.rel (0) target = $region17
    $region16: #{tpu_custom_call.1} parent=1 // pred_region
      %37 = dma.done [#allocation6], 2048
    $region17: #{tpu_custom_call.1} parent=1 // pred_fallthru
      _
    %v38 = vld [vmem:[#allocation2] sm:$0xff]
    %v39 = vld [vmem:[#allocation5] sm:$0xff]
    %v40 = vld [vmem:[#allocation5 + $0x8] sm:$0xff]
    %v41 = vld [vmem:[#allocation5 + $0x10] sm:$0xff]
    %v42 = vld [vmem:[#allocation5 + $0x18] sm:$0xff]
    %v43 = vld [vmem:[#allocation5 + $0x20] sm:$0xff]
    %v44 = vld [vmem:[#allocation5 + $0x28] sm:$0xff]
    %v45 = vld [vmem:[#allocation5 + $0x30] sm:$0xff]
    %v46 = vld [vmem:[#allocation5 + $0x38] sm:$0xff]
    %v47 = vld [vmem:[#allocation5 + $0x40] sm:$0xff]
    %v48 = vld [vmem:[#allocation5 + $0x48] sm:$0xff]
    %v49 = vld [vmem:[#allocation5 + $0x50] sm:$0xff]
    %v50 = vld [vmem:[#allocation5 + $0x58] sm:$0xff]
    %v51 = vld [vmem:[#allocation5 + $0x60] sm:$0xff]
    %v52 = vld [vmem:[#allocation5 + $0x68] sm:$0xff]
    %v53 = vld [vmem:[#allocation5 + $0x70] sm:$0xff]
    %v54 = vld [vmem:[#allocation5 + $0x78] sm:$0x1]
    %56 = vset.pattern.permute.xlu0 0
    %57 = vperm.xlu0 %56, %v47
    %v58 = vpop.permute.xlu0 %57
    %61 = vset.pattern.permute.xlu0 0
    %62 = vperm.xlu0 %61, %v48
    %v63 = vpop.permute.xlu0 %62
    %vm65 = vcmask 64512
    %v67 = vsel %vm65, %v39, 0
    %v70 = vsel %vm65, %v40, 0
    %72 = vmatprep.subr.mxu0 0.0
    %73 = vmatpush1.msra.mxu0 %v38
    %74 = vmatprep.subr.mxu0 0.0
    %75 = vmatpush1.msra.mxu0 0.0
    %76 = vmatprep.subr.mxu0 0.0
    %77 = vmatpush1.msra.mxu0 0.0
    %78 = vmatprep.subr.mxu0 0.0
    %79 = vmatpush1.msra.mxu0 0.0
    %80 = vmatprep.subr.mxu0 0.0
    %81 = vmatpush1.msra.mxu0 0.0
    %82 = vmatprep.subr.mxu0 0.0
    %83 = vmatpush1.msra.mxu0 0.0
    %84 = vmatprep.subr.mxu0 0.0
    %85 = vmatpush1.msra.mxu0 0.0
    %86 = vmatprep.subr.mxu0 0.0
    %87 = vmatpush1.msra.mxu0 0.0
    %88 = vmatprep.subr.mxu0 0.0
    %89 = vmatpush1.msra.mxu0 0.0
    %90 = vmatprep.subr.mxu0 0.0
    %91 = vmatpush1.msra.mxu0 0.0
    %92 = vmatprep.subr.mxu0 0.0
    %93 = vmatpush1.msra.mxu0 0.0
    %94 = vmatprep.subr.mxu0 0.0
    %95 = vmatpush1.msra.mxu0 0.0
    %96 = vmatprep.subr.mxu0 0.0
    %97 = vmatpush1.msra.mxu0 0.0
    %98 = vmatprep.subr.mxu0 0.0
    %99 = vmatpush1.msra.mxu0 0.0
    %100 = vmatprep.subr.mxu0 0.0
    %101 = vmatpush1.msra.mxu0 0.0
    %102 = vmatprep.subr.mxu0 0.0
    %103 = vmatpush1.msra.mxu0 0.0
    %104 = vmatprep.subr.mxu0 0.0
    %105 = vmatpush1.msra.mxu0 0.0
    %106 = vmatprep.subr.mxu0 0.0
    %107 = vmatpush1.msra.mxu0 0.0
    %108 = vmatprep.subr.mxu0 0.0
    %109 = vmatpush1.msra.mxu0 0.0
    %110 = vmatprep.subr.mxu0 0.0
    %111 = vmatpush1.msra.mxu0 0.0
    %112 = vmatprep.subr.mxu0 0.0
    %113 = vmatpush1.msra.mxu0 0.0
    %114 = vmatprep.subr.mxu0 0.0
    %115 = vmatpush1.msra.mxu0 0.0
    %116 = vmatprep.subr.mxu0 0.0
    %117 = vmatpush1.msra.mxu0 0.0
    %118 = vmatprep.subr.mxu0 0.0
    %119 = vmatpush1.msra.mxu0 0.0
    %120 = vmatprep.subr.mxu0 0.0
    %121 = vmatpush1.msra.mxu0 0.0
    %122 = vmatprep.subr.mxu0 0.0
    %123 = vmatpush1.msra.mxu0 0.0
    %124 = vmatprep.subr.mxu0 0.0
    %125 = vmatpush1.msra.mxu0 0.0
    %126 = vmatprep.subr.mxu0 0.0
    %127 = vmatpush1.msra.mxu0 0.0
    %128 = vmatprep.subr.mxu0 0.0
    %129 = vmatpush1.msra.mxu0 0.0
    %130 = vmatprep.subr.mxu0 0.0
    %131 = vmatpush1.msra.mxu0 0.0
    %132 = vmatprep.subr.mxu0 0.0
    %133 = vmatpush1.msra.mxu0 0.0
    %134 = vmatprep.subr.mxu0 0.0
    %135 = vmatpush1.msra.mxu0 0.0
    %136 = vmatprep.mubr.f32.mxu0 0.0
    %137 = vmatmul.mubr.f32.gmra.mrb[0].mxu0 %v67
    %v138 = vpop.f32.mrb[0].mxu0
    %v139 = vadd.f32 %v58, %v138
    %v140 = vpop.f32.mrb[0].mxu0
    %141 = vmatprep.mubr.f32.mxu0 0.0
    %142 = vmatmul.mubr.f32.gmra.mrb[0].mxu0 %v70
    %v143 = vpop.f32.mrb[0].mxu0
    %v144 = vadd.f32 %v63, %v143
    %v145 = vpop.f32.mrb[0].mxu0
    %146 = vdwg.mxu0
    %v147 = vtanh.pop %v139
    %v148 = vtanh.pop %v144
    %150 = vset.pattern.permute.xlu0 0
    %151 = vperm.xlu0 %150, %v49
    %v152 = vpop.permute.xlu0 %151
    %155 = vset.pattern.permute.xlu0 0
    %156 = vperm.xlu0 %155, %v50
    %v157 = vpop.permute.xlu0 %156
    %160 = vset.pattern.permute.xlu0 0
    %161 = vperm.xlu0 %160, %v51
    %v162 = vpop.permute.xlu0 %161
    %165 = vset.pattern.permute.xlu0 0
    %166 = vperm.xlu0 %165, %v52
    %v167 = vpop.permute.xlu0 %166
    %vm169 = vcmask 130048
    %v171 = vsel %vm169, %v41, 0
    %v174 = vsel %vm169, %v42, 0
    %v177 = vsel %vm169, %v43, 0
    %v180 = vsel %vm169, %v44, 0
    %182 = vmatprep.subr.mxu0 0.0
    %183 = vmatpush1.msra.mxu0 %v147
    %184 = vmatprep.subr.mxu0 0.0
    %185 = vmatpush1.msra.mxu0 %v148
    %186 = vmatprep.subr.mxu0 0.0
    %187 = vmatpush1.msra.mxu0 0.0
    %188 = vmatprep.subr.mxu0 0.0
    %189 = vmatpush1.msra.mxu0 0.0
    %190 = vmatprep.subr.mxu0 0.0
    %191 = vmatpush1.msra.mxu0 0.0
    %192 = vmatprep.subr.mxu0 0.0
    %193 = vmatpush1.msra.mxu0 0.0
    %194 = vmatprep.subr.mxu0 0.0
    %195 = vmatpush1.msra.mxu0 0.0
    %196 = vmatprep.subr.mxu0 0.0
    %197 = vmatpush1.msra.mxu0 0.0
    %198 = vmatprep.subr.mxu0 0.0
    %199 = vmatpush1.msra.mxu0 0.0
    %200 = vmatprep.subr.mxu0 0.0
    %201 = vmatpush1.msra.mxu0 0.0
    %202 = vmatprep.subr.mxu0 0.0
    %203 = vmatpush1.msra.mxu0 0.0
    %204 = vmatprep.subr.mxu0 0.0
    %205 = vmatpush1.msra.mxu0 0.0
    %206 = vmatprep.subr.mxu0 0.0
    %207 = vmatpush1.msra.mxu0 0.0
    %208 = vmatprep.subr.mxu0 0.0
    %209 = vmatpush1.msra.mxu0 0.0
    %210 = vmatprep.subr.mxu0 0.0
    %211 = vmatpush1.msra.mxu0 0.0
    %212 = vmatprep.subr.mxu0 0.0
    %213 = vmatpush1.msra.mxu0 0.0
    %214 = vmatprep.subr.mxu0 0.0
    %215 = vmatpush1.msra.mxu0 0.0
    %216 = vmatprep.subr.mxu0 0.0
    %217 = vmatpush1.msra.mxu0 0.0
    %218 = vmatprep.subr.mxu0 0.0
    %219 = vmatpush1.msra.mxu0 0.0
    %220 = vmatprep.subr.mxu0 0.0
    %221 = vmatpush1.msra.mxu0 0.0
    %222 = vmatprep.subr.mxu0 0.0
    %223 = vmatpush1.msra.mxu0 0.0
    %224 = vmatprep.subr.mxu0 0.0
    %225 = vmatpush1.msra.mxu0 0.0
    %226 = vmatprep.subr.mxu0 0.0
    %227 = vmatpush1.msra.mxu0 0.0
    %228 = vmatprep.subr.mxu0 0.0
    %229 = vmatpush1.msra.mxu0 0.0
    %230 = vmatprep.subr.mxu0 0.0
    %231 = vmatpush1.msra.mxu0 0.0
    %232 = vmatprep.subr.mxu0 0.0
    %233 = vmatpush1.msra.mxu0 0.0
    %234 = vmatprep.subr.mxu0 0.0
    %235 = vmatpush1.msra.mxu0 0.0
    %236 = vmatprep.subr.mxu0 0.0
    %237 = vmatpush1.msra.mxu0 0.0
    %238 = vmatprep.subr.mxu0 0.0
    %239 = vmatpush1.msra.mxu0 0.0
    %240 = vmatprep.subr.mxu0 0.0
    %241 = vmatpush1.msra.mxu0 0.0
    %242 = vmatprep.subr.mxu0 0.0
    %243 = vmatpush1.msra.mxu0 0.0
    %244 = vmatprep.subr.mxu0 0.0
    %245 = vmatpush1.msra.mxu0 0.0
    %246 = vmatprep.mubr.f32.mxu0 0.0
    %247 = vmatmul.mubr.f32.gmra.mrb[0].mxu0 %v171
    %v248 = vpop.f32.mrb[0].mxu0
    %v249 = vadd.f32 %v152, %v248
    %v250 = vpop.f32.mrb[0].mxu0
    %251 = vmatprep.mubr.f32.mxu0 0.0
    %252 = vmatmul.mubr.f32.gmra.mrb[0].mxu0 %v174
    %v253 = vpop.f32.mrb[0].mxu0
    %v254 = vadd.f32 %v157, %v253
    %v255 = vpop.f32.mrb[0].mxu0
    %256 = vmatprep.mubr.f32.mxu0 0.0
    %257 = vmatmul.mubr.f32.gmra.mrb[0].mxu0 %v177
    %v258 = vpop.f32.mrb[0].mxu0
    %v259 = vadd.f32 %v162, %v258
    %v260 = vpop.f32.mrb[0].mxu0
    %261 = vmatprep.mubr.f32.mxu0 0.0
    %262 = vmatmul.mubr.f32.gmra.mrb[0].mxu0 %v180
    %v263 = vpop.f32.mrb[0].mxu0
    %v264 = vadd.f32 %v167, %v263
    %v265 = vpop.f32.mrb[0].mxu0
    %266 = vdwg.mxu0
    %v267 = vtanh.pop %v249
    %v268 = vtanh.pop %v254
    %v269 = vtanh.pop %v259
    %v270 = vtanh.pop %v264
    %272 = vset.pattern.permute.xlu0 0
    %273 = vperm.xlu0 %272, %v53
    %v274 = vpop.permute.xlu0 %273
    %vm276 = vcmask 261120
    %v278 = vsel %vm276, %v45, 0
    %280 = vmatprep.subr.mxu0 0.0
    %281 = vmatpush1.msra.mxu0 %v267
    %282 = vmatprep.subr.mxu0 0.0
    %283 = vmatpush1.msra.mxu0 %v268
    %284 = vmatprep.subr.mxu0 0.0
    %285 = vmatpush1.msra.mxu0 %v269
    %286 = vmatprep.subr.mxu0 0.0
    %287 = vmatpush1.msra.mxu0 %v270
    %288 = vmatprep.subr.mxu0 0.0
    %289 = vmatpush1.msra.mxu0 0.0
    %290 = vmatprep.subr.mxu0 0.0
    %291 = vmatpush1.msra.mxu0 0.0
    %292 = vmatprep.subr.mxu0 0.0
    %293 = vmatpush1.msra.mxu0 0.0
    %294 = vmatprep.subr.mxu0 0.0
    %295 = vmatpush1.msra.mxu0 0.0
    %296 = vmatprep.subr.mxu0 0.0
    %297 = vmatpush1.msra.mxu0 0.0
    %298 = vmatprep.subr.mxu0 0.0
    %299 = vmatpush1.msra.mxu0 0.0
    %300 = vmatprep.subr.mxu0 0.0
    %301 = vmatpush1.msra.mxu0 0.0
    %302 = vmatprep.subr.mxu0 0.0
    %303 = vmatpush1.msra.mxu0 0.0
    %304 = vmatprep.subr.mxu0 0.0
    %305 = vmatpush1.msra.mxu0 0.0
    %306 = vmatprep.subr.mxu0 0.0
    %307 = vmatpush1.msra.mxu0 0.0
    %308 = vmatprep.subr.mxu0 0.0
    %309 = vmatpush1.msra.mxu0 0.0
    %310 = vmatprep.subr.mxu0 0.0
    %311 = vmatpush1.msra.mxu0 0.0
    %312 = vmatprep.subr.mxu0 0.0
    %313 = vmatpush1.msra.mxu0 0.0
    %314 = vmatprep.subr.mxu0 0.0
    %315 = vmatpush1.msra.mxu0 0.0
    %316 = vmatprep.subr.mxu0 0.0
    %317 = vmatpush1.msra.mxu0 0.0
    %318 = vmatprep.subr.mxu0 0.0
    %319 = vmatpush1.msra.mxu0 0.0
    %320 = vmatprep.subr.mxu0 0.0
    %321 = vmatpush1.msra.mxu0 0.0
    %322 = vmatprep.subr.mxu0 0.0
    %323 = vmatpush1.msra.mxu0 0.0
    %324 = vmatprep.subr.mxu0 0.0
    %325 = vmatpush1.msra.mxu0 0.0
    %326 = vmatprep.subr.mxu0 0.0
    %327 = vmatpush1.msra.mxu0 0.0
    %328 = vmatprep.subr.mxu0 0.0
    %329 = vmatpush1.msra.mxu0 0.0
    %330 = vmatprep.subr.mxu0 0.0
    %331 = vmatpush1.msra.mxu0 0.0
    %332 = vmatprep.subr.mxu0 0.0
    %333 = vmatpush1.msra.mxu0 0.0
    %334 = vmatprep.subr.mxu0 0.0
    %335 = vmatpush1.msra.mxu0 0.0
    %336 = vmatprep.subr.mxu0 0.0
    %337 = vmatpush1.msra.mxu0 0.0
    %338 = vmatprep.subr.mxu0 0.0
    %339 = vmatpush1.msra.mxu0 0.0
    %340 = vmatprep.subr.mxu0 0.0
    %341 = vmatpush1.msra.mxu0 0.0
    %342 = vmatprep.subr.mxu0 0.0
    %343 = vmatpush1.msra.mxu0 0.0
    %344 = vmatprep.mubr.f32.mxu0 0.0
    %345 = vmatmul.mubr.f32.gmra.mrb[0].mxu0 %v278
    %v346 = vpop.f32.mrb[0].mxu0
    %v347 = vadd.f32 %v274, %v346
    %v348 = vpop.f32.mrb[0].mxu0
    %349 = vdwg.mxu0
    %v350 = vtanh.pop %v347
    %352 = vset.pattern.permute.xlu0 0
    %353 = vperm.xlu0 %352, %v46
    %v354 = vpop.permute.xlu0 %353
    %v356 = vmul.f32 %v350, %v354
    %v357 = vrot.slane %v356, 4
    %v358 = vadd.f32 %v356, %v357
    %v359 = vrot.slane %v358, 2
    %v360 = vadd.f32 %v358, %v359
    %v361 = vrot.slane %v360, 1
    %v362 = vadd.f32 %v360, %v361
    %364 = vset.pattern.permute.xlu0 0
    %365 = vperm.xlu0 %364, %v54
    %v366 = vpop.permute.xlu0 %365
    %v368 = vadd.f32 %v362, %v366
    %v369 = vtanh.pop %v368
    %370 = vst [vmem:[#allocation7] sm:$0x1] %v369
    // Predicated region
    $region18: #{tpu_custom_call.1} parent=1 // pred_check
      _
    $region19: #{tpu_custom_call.1} parent=1 // pred_check_branch
      %372 = sbr.rel (0) target = $region21
    $region20: #{tpu_custom_call.1} parent=1 // pred_region
      %s374 = ssub.s32 16, 16
      %375 = vsyncadd [#allocation4], %s374
      %s377 = sshll.u32 [#allocation7], 4
      %s378 = int_to_ptr.vmem [resolvable:$true] %s377
      %380 = dma.vmem_to_hbm [thread:$0]  %s378, 16, %s2, [#allocation4]
    $region21: #{tpu_custom_call.1} parent=1 // pred_fallthru
      _
    // Predicated region
    $region22: #{tpu_custom_call.1} parent=1 // pred_check
      _
    $region23: #{tpu_custom_call.1} parent=1 // pred_check_branch
      %382 = sbr.rel (0) target = $region25
    $region24: #{tpu_custom_call.1} parent=1 // pred_region
      %383 = dma.done [#allocation4], 16
    $region25: #{tpu_custom_call.1} parent=1 // pred_fallthru
      _
    %384 = vsyncpa [#allocation3], 1
    %385 = vsyncpa [#allocation6], 1
    %386 = vsyncpa [#allocation4], 1

</llo_original>
